<compile_context>
chip_gen: v6e
topology: v6e:2x2x1
jax: 0.10.0
libtpu: 0.0.40
codegen_flags: <defaults>
</compile_context>

<pallas_src>
import jax
import jax.numpy as jnp
from jax import lax
from jax.experimental import pallas as pl
from jax.experimental.pallas import tpu as pltpu


def _net_kernel(p_ref, w_ref, b_ref, o_ref):
    """Fused conv-as-matmul + 2x2 max-pool + bias + ReLU + sigmoid.

    p_ref: (4, tm, KKC)  four 2x2-pool candidates x tm pooled-output rows (im2col)
    w_ref: (KKC, CPAD)   lane-padded flattened conv weights
    b_ref: (1, CPAD)     lane-padded bias
    o_ref: (tm, CPAD)    lane-dense pooled output rows, ordered (n, h2, w2)
    """
    w = w_ref[...]
    # Conv for each pool candidate + incremental max-pool (keeps vreg pressure low).
    y = jnp.maximum(
        jnp.dot(p_ref[0], w, preferred_element_type=jnp.float32),
        jnp.dot(p_ref[1], w, preferred_element_type=jnp.float32))
    y = jnp.maximum(y, jnp.dot(p_ref[2], w, preferred_element_type=jnp.float32))
    y = jnp.maximum(y, jnp.dot(p_ref[3], w, preferred_element_type=jnp.float32))
    # Bias + ReLU after the pool (both commute with the spatial max).
    y = jnp.maximum(y + b_ref[...], 0.0)
    # TODO(synk): Dropout(p=0.2) is identity in eval/inference mode; training-mode
    # stochastic masking (pltpu.prng_*) not implemented.
    o_ref[...] = jax.nn.sigmoid(y).astype(o_ref.dtype)


def _pick_row_tile(m_rows, cap=512):
    """Largest multiple-of-8 divisor of m_rows <= cap, preferring >= 2 grid steps."""
    assert m_rows % 8 == 0, m_rows
    limit = min(cap, m_rows)
    if m_rows >= 16:
        limit = min(limit, m_rows // 2)   # at least 2 grid steps when possible
    tm = 8
    t = 8
    while t <= limit:
        if m_rows % t == 0:
            tm = t
        t += 8
    return tm


@jax.jit
def net_forward(x_nchw, w_hwio, bias):
    """Forward pass of Net. x_nchw: (N, Cin, H, W) f32, w_hwio: (K, K, Cin, Cout)."""
    N, Cin, H, W = x_nchw.shape
    K = w_hwio.shape[0]
    Cout = w_hwio.shape[-1]
    assert H % 2 == 0 and W % 2 == 0
    H2, W2 = H // 2, W // 2
    KKC = K * K * Cin
    CPAD = 128                      # lane-pad the output-channel dimension
    M = N * H2 * W2                 # pooled output rows
    tm = _pick_row_tile(M)

    # NCHW -> NHWC, 1-px halo, im2col features ordered (kh, kw, ci) to match
    # w_hwio.reshape(KKC, Cout).
    x_nhwc = jnp.transpose(x_nchw, (0, 2, 3, 1))
    xp = jnp.pad(x_nhwc, ((0, 0), (1, 1), (1, 1), (0, 0)))
    cols = [xp[:, kh:kh + H, kw:kw + W, :] for kh in range(K) for kw in range(K)]
    feat = jnp.concatenate(cols, axis=-1)                      # (N, H, W, KKC)
    # Reorder rows to (hp, wp, n, h2, w2) so pool partners are contiguous slabs.
    feat = feat.reshape(N, H2, 2, W2, 2, KKC)
    feat = jnp.transpose(feat, (2, 4, 0, 1, 3, 5))             # (hp, wp, n, h2, w2, KKC)
    patches = feat.reshape(4, M, KKC)

    # Lane-padded weights / bias (zero columns Cout..127 sliced off below).
    w_pad = jnp.pad(w_hwio.reshape(KKC, Cout), ((0, 0), (0, CPAD - Cout)))
    b_pad = jnp.pad(bias, (0, CPAD - Cout)).reshape(1, CPAD)

    cost = pl.CostEstimate(
        flops=2 * 4 * M * KKC * Cout,
        transcendentals=M * Cout,
        bytes_accessed=4 * (patches.size + w_pad.size + b_pad.size + M * CPAD),
    )

    out2d = pl.pallas_call(
        _net_kernel,
        out_shape=jax.ShapeDtypeStruct((M, CPAD), jnp.float32),
        grid_spec=pltpu.PrefetchScalarGridSpec(
            num_scalar_prefetch=0,
            grid=(M // tm,),
            in_specs=[
                pl.BlockSpec((4, tm, KKC), lambda i: (0, i, 0)),
                pl.BlockSpec((KKC, CPAD), lambda i: (0, 0)),
                pl.BlockSpec((1, CPAD), lambda i: (0, 0)),
            ],
            out_specs=pl.BlockSpec((tm, CPAD), lambda i: (i, 0)),
        ),
        compiler_params=pltpu.CompilerParams(
            dimension_semantics=("parallel",),
            vmem_limit_bytes=32 * 1024 * 1024,
        ),
        cost_estimate=cost,
    )(patches, w_pad, b_pad)

    # Drop lane padding; match PyTorch NCHW output convention.
    out = out2d.reshape(N, H2, W2, CPAD)[..., :Cout]
    return jnp.transpose(out, (0, 3, 1, 2))


def _reference_forward(x_nchw, w_hwio, bias):
    """Pure-JAX reference (NHWC conv + relu + maxpool + sigmoid)."""
    x = jnp.transpose(x_nchw, (0, 2, 3, 1))
    y = lax.conv_general_dilated(
        x, w_hwio, window_strides=(1, 1), padding="SAME",
        dimension_numbers=("NHWC", "HWIO", "NHWC"))
    y = y + bias
    y = jnp.maximum(y, 0.0)
    y = lax.reduce_window(y, -jnp.inf, lax.max,
                          window_dimensions=(1, 2, 2, 1),
                          window_strides=(1, 2, 2, 1),
                          padding="VALID")
    y = jax.nn.sigmoid(y)
    return jnp.transpose(y, (0, 3, 1, 2))


if __name__ == "__main__":
    # Small shapes consistent with the module: Cin (input_shape) = 4, Cout = 10.
    N, Cin, H, W = 2, 4, 16, 16
    K, Cout = 3, 10

    key = jax.random.PRNGKey(0)
    kx, kw, kb = jax.random.split(key, 3)

    x = jax.random.normal(kx, (N, Cin, H, W), dtype=jnp.float32)
    fan_in = Cin * K * K
    bound = 1.0 / (fan_in ** 0.5)
    w_hwio = jax.random.uniform(kw, (K, K, Cin, Cout), jnp.float32,
                                minval=-bound, maxval=bound)
    bias = jax.random.uniform(kb, (Cout,), jnp.float32,
                              minval=-bound, maxval=bound)

    out = net_forward(x, w_hwio, bias)
    out = jax.block_until_ready(out)

    ref = _reference_forward(x, w_hwio, bias)
    assert out.shape == (N, Cout, H // 2, W // 2), out.shape
    assert jnp.allclose(out, ref, atol=1e-5, rtol=1e-5), "mismatch vs reference"

    print("KERNEL_OK")
</pallas_src>

<mosaic_0001>
module attributes {stable_mosaic.version = 11 : i64} {
  func.func @_net_kernel(%arg0: i32, %arg1: memref<4x64x36xf32, #tpu.memory_space<vmem>>, %arg2: memref<36x128xf32, #tpu.memory_space<vmem>>, %arg3: memref<1x128xf32, #tpu.memory_space<vmem>>, %arg4: memref<64x128xf32, #tpu.memory_space<vmem>>) attributes {dimension_semantics = [#tpu.dimension_semantics<parallel>], iteration_bounds = array<i64: 2>, scalar_prefetch = 0 : i64, scratch_operands = 0 : i64, tpu.core_type = #tpu.core_type<tc>, window_params = [{transform_indices = @transform_0, window_bounds = array<i64: 4, 64, 36>}, {pipeline_mode = #tpu.pipeline_mode<synchronous>, transform_indices = @transform_1, window_bounds = array<i64: 36, 128>}, {pipeline_mode = #tpu.pipeline_mode<synchronous>, transform_indices = @transform_2, window_bounds = array<i64: 1, 128>}, {transform_indices = @transform_3, window_bounds = array<i64: 64, 128>}]} {
    %c0 = arith.constant 0 : index
    %c0_0 = arith.constant 0 : index
    %0 = vector.load %arg2[%c0, %c0_0] : memref<36x128xf32, #tpu.memory_space<vmem>>, vector<36x128xf32>
    %c0_1 = arith.constant 0 : index
    %c0_2 = arith.constant 0 : index
    %c0_3 = arith.constant 0 : index
    %1 = vector.load %arg1[%c0_1, %c0_2, %c0_3] : memref<4x64x36xf32, #tpu.memory_space<vmem>>, vector<1x64x36xf32>
    %2 = vector.shape_cast %1 : vector<1x64x36xf32> to vector<64x36xf32>
    %cst = arith.constant dense<0.000000e+00> : vector<64x128xf32>
    %3 = tpu.matmul %2, %0, %cst {dimension_numbers = #tpu.dot_dimension_numbers<[1], [0], [0], [1], [0, 0, 1, 1], [], []>} : vector<64x36xf32>, vector<36x128xf32>, vector<64x128xf32> -> vector<64x128xf32>
    %c1 = arith.constant 1 : index
    %c0_4 = arith.constant 0 : index
    %c0_5 = arith.constant 0 : index
    %4 = vector.load %arg1[%c1, %c0_4, %c0_5] : memref<4x64x36xf32, #tpu.memory_space<vmem>>, vector<1x64x36xf32>
    %5 = vector.shape_cast %4 : vector<1x64x36xf32> to vector<64x36xf32>
    %cst_6 = arith.constant dense<0.000000e+00> : vector<64x128xf32>
    %6 = tpu.matmul %5, %0, %cst_6 {dimension_numbers = #tpu.dot_dimension_numbers<[1], [0], [0], [1], [0, 0, 1, 1], [], []>} : vector<64x36xf32>, vector<36x128xf32>, vector<64x128xf32> -> vector<64x128xf32>
    %7 = arith.maximumf %3, %6 : vector<64x128xf32>
    %c2 = arith.constant 2 : index
    %c0_7 = arith.constant 0 : index
    %c0_8 = arith.constant 0 : index
    %8 = vector.load %arg1[%c2, %c0_7, %c0_8] : memref<4x64x36xf32, #tpu.memory_space<vmem>>, vector<1x64x36xf32>
    %9 = vector.shape_cast %8 : vector<1x64x36xf32> to vector<64x36xf32>
    %cst_9 = arith.constant dense<0.000000e+00> : vector<64x128xf32>
    %10 = tpu.matmul %9, %0, %cst_9 {dimension_numbers = #tpu.dot_dimension_numbers<[1], [0], [0], [1], [0, 0, 1, 1], [], []>} : vector<64x36xf32>, vector<36x128xf32>, vector<64x128xf32> -> vector<64x128xf32>
    %11 = arith.maximumf %7, %10 : vector<64x128xf32>
    %c3 = arith.constant 3 : index
    %c0_10 = arith.constant 0 : index
    %c0_11 = arith.constant 0 : index
    %12 = vector.load %arg1[%c3, %c0_10, %c0_11] : memref<4x64x36xf32, #tpu.memory_space<vmem>>, vector<1x64x36xf32>
    %13 = vector.shape_cast %12 : vector<1x64x36xf32> to vector<64x36xf32>
    %cst_12 = arith.constant dense<0.000000e+00> : vector<64x128xf32>
    %14 = tpu.matmul %13, %0, %cst_12 {dimension_numbers = #tpu.dot_dimension_numbers<[1], [0], [0], [1], [0, 0, 1, 1], [], []>} : vector<64x36xf32>, vector<36x128xf32>, vector<64x128xf32> -> vector<64x128xf32>
    %15 = arith.maximumf %11, %14 : vector<64x128xf32>
    %c0_13 = arith.constant 0 : index
    %c0_14 = arith.constant 0 : index
    %16 = vector.load %arg3[%c0_13, %c0_14] : memref<1x128xf32, #tpu.memory_space<vmem>>, vector<1x128xf32>
    %17 = vector.broadcast %16 : vector<1x128xf32> to vector<64x128xf32>
    %18 = arith.addf %15, %17 : vector<64x128xf32>
    %cst_15 = arith.constant 0.000000e+00 : f32
    %19 = vector.broadcast %cst_15 : f32 to vector<64x128xf32>
    %20 = arith.maximumf %18, %19 : vector<64x128xf32>
    %21 = arith.negf %20 : vector<64x128xf32>
    %22 = math.exp %21 : vector<64x128xf32>
    %cst_16 = arith.constant 1.000000e+00 : f32
    %23 = vector.broadcast %cst_16 : f32 to vector<64x128xf32>
    %24 = arith.addf %23, %22 : vector<64x128xf32>
    %25 = arith.divf %23, %24 : vector<64x128xf32>
    %c0_17 = arith.constant 0 : index
    %c0_18 = arith.constant 0 : index
    %26 = vector.load %arg4[%c0_17, %c0_18] : memref<64x128xf32, #tpu.memory_space<vmem>>, vector<64x128xf32>
    tpu.vector_store %arg4[%c0_17, %c0_18], %25 {strides = array<i32>} : memref<64x128xf32, #tpu.memory_space<vmem>>, vector<64x128xf32>,
    return
  }
  func.func @transform_0(%arg0: i32) -> (i32, i32, i32) {
    %c0_i32 = arith.constant 0 : i32
    %c0_i32_0 = arith.constant 0 : i32
    %c0_i32_1 = arith.constant 0 : i32
    return %c0_i32, %arg0, %c0_i32_0 : i32, i32, i32
  }
  func.func @transform_1(%arg0: i32) -> (i32, i32) {
    %c0_i32 = arith.constant 0 : i32
    %c0_i32_0 = arith.constant 0 : i32
    %c0_i32_1 = arith.constant 0 : i32
    return %c0_i32, %c0_i32_0 : i32, i32
  }
  func.func @transform_2(%arg0: i32) -> (i32, i32) {
    %c0_i32 = arith.constant 0 : i32
    %c0_i32_0 = arith.constant 0 : i32
    %c0_i32_1 = arith.constant 0 : i32
    return %c0_i32, %c0_i32_0 : i32, i32
  }
  func.func @transform_3(%arg0: i32) -> (i32, i32) {
    %c0_i32 = arith.constant 0 : i32
    %c0_i32_0 = arith.constant 0 : i32
    return %arg0, %c0_i32 : i32, i32
  }
}

</mosaic_0001>

<llo_original>
// kernel: net_forward.1
$region0: #{net_forward.1}
  #allocation0 [shape = 'u32[]', space=smem, size = 0x4, offset = 0x4, fixed_abs, tag = 'smem constant byte address 0x4 - core index']
  #allocation1 [shape = 'u32[144,128]{1,0:T(1,128)}', space=vmem, size = 0x12000, scoped, tag = 'internal scratch']
  %s0 = inlined_call_operand.vmem [shape: f32[4,128,36], index: 0, kind: input, shape index: {}]
  %s1 = inlined_call_operand.vmem [shape: f32[36,128], index: 1, kind: input, shape index: {}]
  %s2 = inlined_call_operand.vmem [shape: f32[1,128], index: 2, kind: input, shape index: {}]
  %s3 = inlined_call_operand.vmem [shape: f32[128,128], index: 3, kind: output, shape index: {}]
  %s4 = sld [smem:[#allocation0]]
  $region83: #{net_forward.1} parent=0
    _
  %s6 = ssub.s32 1, %s4
  %s7 = scalar_select 0, %s6, %s4
  $region1: #{net_forward.1} parent=0
    #allocation2 [shape = 'u8[262144]{0}', space=vmem, size = 0x40000, scoped, tag = 'input window, operand 0']
    loop: start=0, step=1, limit=4
    $region2: #{net_forward.1} parent=1 // loop_pre_header
      _
    $region3: #{net_forward.1} parent=1 // loop_header
      %s9 = sphi 0, %s13
      %p10 = scmp.ge.s32.totalorder %s9, 4
      %s19 = sphi 0, %s21
      %s22 = sphi 0, %s19
      %s23 = sphi 0, %s22
      %s39 = sphi 0, %s23
      %s43 = sphi 0, %s43
      %s45 = sphi 0, %s43
      %s46 = sphi 0, %s45
      %s60 = sphi 0, %s46
      %s64 = sphi 0, %s64
      %s66 = sphi 0, %s64
      %s67 = sphi 0, %s66
      %s81 = sphi 0, %s67
      %s87 = sphi 0, %s89
      %s90 = sphi 0, %s87
      %s91 = sphi 0, %s90
      %s107 = sphi 0, %s91
    $region4: #{net_forward.1} parent=1 // loop_header_branch
      %12 = sbr.rel (%p10) target = $region8
    $region5: #{net_forward.1} parent=1 // loop_body
      %s14 = ssub.s32 %s9, 1
      %s15 = ssub.s32 %s9, 2
      %s16 = sadd.s32 %s9, 1
      %s17 = ssub.s32 %s9, %s16
      %p18 = scmp.eq.s32.totalorder %s17, 0
      %s20 = sadd.s32 %s19, 1
      %s21 = scalar_select %p18, %s19, %s20
      %p24 = pneg %p18
      %p25 = scmp.eq.s32.totalorder %s9, 1
      %p26 = por %p24, %p25
      %p27 = scmp.ne.s32.totalorder %s19, %s22
      %p28 = scmp.eq.s32.totalorder %s9, 0
      %p29 = por %p27, %p28
      %p30 = scmp.ne.s32.totalorder %s19, %s22
      %p31 = scmp.eq.s32.totalorder %s14, 1
      %p32 = por %p30, %p31
      %p33 = scmp.ne.s32.totalorder %s22, %s23
      %p34 = scmp.eq.s32.totalorder %s14, 0
      %p35 = por %p33, %p34
      %p36 = scmp.ne.s32.totalorder %s22, %s23
      %p37 = scmp.eq.s32.totalorder %s15, 1
      %p38 = por %p36, %p37
      %p40 = scmp.ne.s32.totalorder %s23, %s39
      %p41 = scmp.eq.s32.totalorder %s15, 0
      %p42 = por %p40, %p41
      %s44 = sadd.s32 %s43, 1
      %p47 = scmp.eq.s32.totalorder %s9, 1
      %p48 = scmp.ne.s32.totalorder %s43, %s45
      %p49 = scmp.eq.s32.totalorder %s9, 0
      %p50 = por %p48, %p49
      %p51 = scmp.ne.s32.totalorder %s43, %s45
      %p52 = scmp.eq.s32.totalorder %s14, 1
      %p53 = por %p51, %p52
      %p54 = scmp.ne.s32.totalorder %s45, %s46
      %p55 = scmp.eq.s32.totalorder %s14, 0
      %p56 = por %p54, %p55
      %p57 = scmp.ne.s32.totalorder %s45, %s46
      %p58 = scmp.eq.s32.totalorder %s15, 1
      %p59 = por %p57, %p58
      %p61 = scmp.ne.s32.totalorder %s46, %s60
      %p62 = scmp.eq.s32.totalorder %s15, 0
      %p63 = por %p61, %p62
      %s65 = sadd.s32 %s64, 1
      %p68 = scmp.eq.s32.totalorder %s9, 1
      %p69 = scmp.ne.s32.totalorder %s64, %s66
      %p70 = scmp.eq.s32.totalorder %s9, 0
      %p71 = por %p69, %p70
      %p72 = scmp.ne.s32.totalorder %s64, %s66
      %p73 = scmp.eq.s32.totalorder %s14, 1
      %p74 = por %p72, %p73
      %p75 = scmp.ne.s32.totalorder %s66, %s67
      %p76 = scmp.eq.s32.totalorder %s14, 0
      %p77 = por %p75, %p76
      %p78 = scmp.ne.s32.totalorder %s66, %s67
      %p79 = scmp.eq.s32.totalorder %s15, 1
      %p80 = por %p78, %p79
      %p82 = scmp.ne.s32.totalorder %s67, %s81
      %p83 = scmp.eq.s32.totalorder %s15, 0
      %p84 = por %p82, %p83
      %s85 = ssub.s32 %s9, %s16
      %p86 = scmp.eq.s32.totalorder %s85, 0
      %s88 = sadd.s32 %s87, 1
      %s89 = scalar_select %p86, %s87, %s88
      %p92 = pneg %p86
      %p93 = scmp.eq.s32.totalorder %s9, 1
      %p94 = por %p92, %p93
      %p95 = scmp.ne.s32.totalorder %s87, %s90
      %p96 = scmp.eq.s32.totalorder %s9, 0
      %p97 = por %p95, %p96
      %p98 = scmp.ne.s32.totalorder %s87, %s90
      %p99 = scmp.eq.s32.totalorder %s14, 1
      %p100 = por %p98, %p99
      %p101 = scmp.ne.s32.totalorder %s90, %s91
      %p102 = scmp.eq.s32.totalorder %s14, 0
      %p103 = por %p101, %p102
      %p104 = scmp.ne.s32.totalorder %s90, %s91
      %p105 = scmp.eq.s32.totalorder %s15, 1
      %p106 = por %p104, %p105
      %p108 = scmp.ne.s32.totalorder %s91, %s107
      %p109 = scmp.eq.s32.totalorder %s15, 0
      %p110 = por %p108, %p109
      %p111 = scmp.le.s32.totalorder 1, %s9
      %p112 = scmp.lt.s32.totalorder %s9, 3
      %p113 = pnand %p111, %p112
      %p114 = pneg %p113
      // Predicated region
      $region9: #{net_forward.1} parent=5 // pred_check
        _
      $region10: #{net_forward.1} parent=5 // pred_check_branch
        %116 = sbr.rel (%p113) target = $region12
      $region11: #{net_forward.1} parent=5 // pred_region
        %s117 = ssub.s32 %s9, 1
        // Predicated region
        $region13: #{net_forward.1} parent=11 // pred_check
          %p118 = pneg %p56
        $region14: #{net_forward.1} parent=11 // pred_check_branch
          %120 = sbr.rel (%p118) target = $region16
        $region15: #{net_forward.1} parent=11 // pred_region
          _
        $region16: #{net_forward.1} parent=11 // pred_fallthru
          _
        // Predicated region
        $region17: #{net_forward.1} parent=11 // pred_check
          %p121 = pneg %p77
        $region18: #{net_forward.1} parent=11 // pred_check_branch
          %123 = sbr.rel (%p121) target = $region20
        $region19: #{net_forward.1} parent=11 // pred_region
          _
        $region20: #{net_forward.1} parent=11 // pred_fallthru
          _
      $region12: #{net_forward.1} parent=5 // pred_fallthru
        _
      %p124 = scmp.lt.s32.totalorder %s9, 2
      // Predicated region
      $region21: #{net_forward.1} parent=5 // pred_check
        %p125 = pneg %p124
      $region22: #{net_forward.1} parent=5 // pred_check_branch
        %127 = sbr.rel (%p125) target = $region24
      $region23: #{net_forward.1} parent=5 // pred_region
        // Predicated region
        $region25: #{net_forward.1} parent=23 // pred_check
          %p128 = pneg %p29
        $region26: #{net_forward.1} parent=23 // pred_check_branch
          %130 = sbr.rel (%p128) target = $region28
        $region27: #{net_forward.1} parent=23 // pred_region
          %s131 = sand.u32 %s19, 1
          %s132 = sand.u32 %s19, 1
          %s133 = smul.addr %s132, 256
          %s134 = scalar_lea.vmem [#allocation2], %s133
          %s135 = smul.u32 8, %s9
          %s136 = smul.addr %s135, 8
          %s137 = scalar_lea.vmem %s0, %s136
          // Predicated region
          $region29: #{net_forward.1} parent=27 // pred_check
            _
          $region30: #{net_forward.1} parent=27 // pred_check_branch
            %139 = sbr.rel (0) target = $region32
          $region31: #{net_forward.1} parent=27 // pred_region
            // Predicated region
            $region33: #{net_forward.1} parent=31 // pred_check
              _
            $region34: #{net_forward.1} parent=31 // pred_check_branch
              %141 = sbr.rel (0) target = $region36
            $region35: #{net_forward.1} parent=31 // pred_region
              // Predicated region
              $region48: #{net_forward.1} parent=35 // pred_check
                _
              $region49: #{net_forward.1} parent=35 // pred_check_branch
                %219 = sbr.rel (0) target = $region51
              $region50: #{net_forward.1} parent=35 // pred_region
                loop: start=0, step=1, limit=1
                $region52: #{net_forward.1} parent=50 // loop_pre_header
                  _
                $region53: #{net_forward.1} parent=50 // loop_header
                  %s221 = sphi 0, %s225
                  %p222 = scmp.ge.s32.totalorder %s221, 1
                  %s226 = sphi %s137, %s137
                  %s227 = sphi %s134, %s134
                $region54: #{net_forward.1} parent=50 // loop_header_branch
                  %224 = sbr.rel (%p222) target = $region58
                $region55: #{net_forward.1} parent=50 // loop_body
                  %v228 = vld [vmem:[%s226] sm:$0xff]
                  %229 = vst [vmem:[%s227] sm:$0xff] %v228
                  %v230 = vld [vmem:[%s226 + $0x8] sm:$0xff]
                  %231 = vst [vmem:[%s227 + $0x8] sm:$0xff] %v230
                  %v232 = vld [vmem:[%s226 + $0x10] sm:$0xff]
                  %233 = vst [vmem:[%s227 + $0x10] sm:$0xff] %v232
                  %v234 = vld [vmem:[%s226 + $0x18] sm:$0xff]
                  %235 = vst [vmem:[%s227 + $0x18] sm:$0xff] %v234
                  %v236 = vld [vmem:[%s226 + $0x20] sm:$0xff]
                  %237 = vst [vmem:[%s227 + $0x20] sm:$0xff] %v236
                  %v238 = vld [vmem:[%s226 + $0x28] sm:$0xff]
                  %239 = vst [vmem:[%s227 + $0x28] sm:$0xff] %v238
                  %v240 = vld [vmem:[%s226 + $0x30] sm:$0xff]
                  %241 = vst [vmem:[%s227 + $0x30] sm:$0xff] %v240
                  %v242 = vld [vmem:[%s226 + $0x38] sm:$0xff]
                  %243 = vst [vmem:[%s227 + $0x38] sm:$0xff] %v242
                  %v244 = vld [vmem:[%s226 + $0x80] sm:$0xff]
                  %245 = vst [vmem:[%s227 + $0x40] sm:$0xff] %v244
                  %v246 = vld [vmem:[%s226 + $0x88] sm:$0xff]
                  %247 = vst [vmem:[%s227 + $0x48] sm:$0xff] %v246
                  %v248 = vld [vmem:[%s226 + $0x90] sm:$0xff]
                  %249 = vst [vmem:[%s227 + $0x50] sm:$0xff] %v248
                  %v250 = vld [vmem:[%s226 + $0x98] sm:$0xff]
                  %251 = vst [vmem:[%s227 + $0x58] sm:$0xff] %v250
                  %v252 = vld [vmem:[%s226 + $0xa0] sm:$0xff]
                  %253 = vst [vmem:[%s227 + $0x60] sm:$0xff] %v252
                  %v254 = vld [vmem:[%s226 + $0xa8] sm:$0xff]
                  %255 = vst [vmem:[%s227 + $0x68] sm:$0xff] %v254
                  %v256 = vld [vmem:[%s226 + $0xb0] sm:$0xff]
                  %257 = vst [vmem:[%s227 + $0x70] sm:$0xff] %v256
                  %v258 = vld [vmem:[%s226 + $0xb8] sm:$0xff]
                  %259 = vst [vmem:[%s227 + $0x78] sm:$0xff] %v258
                  %v260 = vld [vmem:[%s226 + $0x100] sm:$0xff]
                  %261 = vst [vmem:[%s227 + $0x80] sm:$0xff] %v260
                  %v262 = vld [vmem:[%s226 + $0x108] sm:$0xff]
                  %263 = vst [vmem:[%s227 + $0x88] sm:$0xff] %v262
                  %v264 = vld [vmem:[%s226 + $0x110] sm:$0xff]
                  %265 = vst [vmem:[%s227 + $0x90] sm:$0xff] %v264
                  %v266 = vld [vmem:[%s226 + $0x118] sm:$0xff]
                  %267 = vst [vmem:[%s227 + $0x98] sm:$0xff] %v266
                  %v268 = vld [vmem:[%s226 + $0x120] sm:$0xff]
                  %269 = vst [vmem:[%s227 + $0xa0] sm:$0xff] %v268
                  %v270 = vld [vmem:[%s226 + $0x128] sm:$0xff]
                  %271 = vst [vmem:[%s227 + $0xa8] sm:$0xff] %v270
                  %v272 = vld [vmem:[%s226 + $0x130] sm:$0xff]
                  %273 = vst [vmem:[%s227 + $0xb0] sm:$0xff] %v272
                  %v274 = vld [vmem:[%s226 + $0x138] sm:$0xff]
                  %275 = vst [vmem:[%s227 + $0xb8] sm:$0xff] %v274
                  %v276 = vld [vmem:[%s226 + $0x180] sm:$0xff]
                  %277 = vst [vmem:[%s227 + $0xc0] sm:$0xff] %v276
                  %v278 = vld [vmem:[%s226 + $0x188] sm:$0xff]
                  %279 = vst [vmem:[%s227 + $0xc8] sm:$0xff] %v278
                  %v280 = vld [vmem:[%s226 + $0x190] sm:$0xff]
                  %281 = vst [vmem:[%s227 + $0xd0] sm:$0xff] %v280
                  %v282 = vld [vmem:[%s226 + $0x198] sm:$0xff]
                  %283 = vst [vmem:[%s227 + $0xd8] sm:$0xff] %v282
                  %v284 = vld [vmem:[%s226 + $0x1a0] sm:$0xff]
                  %285 = vst [vmem:[%s227 + $0xe0] sm:$0xff] %v284
                  %v286 = vld [vmem:[%s226 + $0x1a8] sm:$0xff]
                  %287 = vst [vmem:[%s227 + $0xe8] sm:$0xff] %v286
                  %v288 = vld [vmem:[%s226 + $0x1b0] sm:$0xff]
                  %289 = vst [vmem:[%s227 + $0xf0] sm:$0xff] %v288
                  %v290 = vld [vmem:[%s226 + $0x1b8] sm:$0xff]
                  %291 = vst [vmem:[%s227 + $0xf8] sm:$0xff] %v290
                $region56: #{net_forward.1} parent=50 // loop_footer
                  %s225 = sadd.s32 1, %s221
                $region57: #{net_forward.1} parent=50 // loop_footer_branch
                  %220 = sbr.rel target = $region53
                $region58: #{net_forward.1} parent=50 // loop_exit
                  _
              $region51: #{net_forward.1} parent=35 // pred_fallthru
                _
              // Predicated region
              $region59: #{net_forward.1} parent=35 // pred_check
                _
              $region60: #{net_forward.1} parent=35 // pred_check_branch
                %293 = sbr.rel target = $region62
              $region61: #{net_forward.1} parent=35 // pred_region
                _
              $region62: #{net_forward.1} parent=35 // pred_fallthru
                _
            $region36: #{net_forward.1} parent=31 // pred_fallthru
              _
            // Predicated region
            $region37: #{net_forward.1} parent=31 // pred_check
              _
            $region38: #{net_forward.1} parent=31 // pred_check_branch
              %143 = sbr.rel target = $region40
            $region39: #{net_forward.1} parent=31 // pred_region
              %s145 = ssub.s32 256, 1
              loop: start=0, step=1, limit=1
              $region41: #{net_forward.1} parent=39 // loop_pre_header
                _
              $region42: #{net_forward.1} parent=39 // loop_header
                %s147 = sphi 0, %s151
                %p148 = scmp.ge.s32.totalorder %s147, 1
                %s152 = sphi %s137, %s137
                %s153 = sphi %s134, %s134
              $region43: #{net_forward.1} parent=39 // loop_header_branch
                %150 = sbr.rel (%p148) target = $region47
              $region44: #{net_forward.1} parent=39 // loop_body
                %v154 = vld [vmem:[%s152] sm:%s145]
                %155 = vst [vmem:[%s153] sm:%s145] %v154
                %v156 = vld [vmem:[%s152 + $0x8] sm:%s145]
                %157 = vst [vmem:[%s153 + $0x8] sm:%s145] %v156
                %v158 = vld [vmem:[%s152 + $0x10] sm:%s145]
                %159 = vst [vmem:[%s153 + $0x10] sm:%s145] %v158
                %v160 = vld [vmem:[%s152 + $0x18] sm:%s145]
                %161 = vst [vmem:[%s153 + $0x18] sm:%s145] %v160
                %v162 = vld [vmem:[%s152 + $0x20] sm:%s145]
                %163 = vst [vmem:[%s153 + $0x20] sm:%s145] %v162
                %v164 = vld [vmem:[%s152 + $0x28] sm:%s145]
                %165 = vst [vmem:[%s153 + $0x28] sm:%s145] %v164
                %v166 = vld [vmem:[%s152 + $0x30] sm:%s145]
                %167 = vst [vmem:[%s153 + $0x30] sm:%s145] %v166
                %v168 = vld [vmem:[%s152 + $0x38] sm:%s145]
                %169 = vst [vmem:[%s153 + $0x38] sm:%s145] %v168
                %v170 = vld [vmem:[%s152 + $0x80] sm:%s145]
                %171 = vst [vmem:[%s153 + $0x40] sm:%s145] %v170
                %v172 = vld [vmem:[%s152 + $0x88] sm:%s145]
                %173 = vst [vmem:[%s153 + $0x48] sm:%s145] %v172
                %v174 = vld [vmem:[%s152 + $0x90] sm:%s145]
                %175 = vst [vmem:[%s153 + $0x50] sm:%s145] %v174
                %v176 = vld [vmem:[%s152 + $0x98] sm:%s145]
                %177 = vst [vmem:[%s153 + $0x58] sm:%s145] %v176
                %v178 = vld [vmem:[%s152 + $0xa0] sm:%s145]
                %179 = vst [vmem:[%s153 + $0x60] sm:%s145] %v178
                %v180 = vld [vmem:[%s152 + $0xa8] sm:%s145]
                %181 = vst [vmem:[%s153 + $0x68] sm:%s145] %v180
                %v182 = vld [vmem:[%s152 + $0xb0] sm:%s145]
                %183 = vst [vmem:[%s153 + $0x70] sm:%s145] %v182
                %v184 = vld [vmem:[%s152 + $0xb8] sm:%s145]
                %185 = vst [vmem:[%s153 + $0x78] sm:%s145] %v184
                %v186 = vld [vmem:[%s152 + $0x100] sm:%s145]
                %187 = vst [vmem:[%s153 + $0x80] sm:%s145] %v186
                %v188 = vld [vmem:[%s152 + $0x108] sm:%s145]
                %189 = vst [vmem:[%s153 + $0x88] sm:%s145] %v188
                %v190 = vld [vmem:[%s152 + $0x110] sm:%s145]
                %191 = vst [vmem:[%s153 + $0x90] sm:%s145] %v190
                %v192 = vld [vmem:[%s152 + $0x118] sm:%s145]
                %193 = vst [vmem:[%s153 + $0x98] sm:%s145] %v192
                %v194 = vld [vmem:[%s152 + $0x120] sm:%s145]
                %195 = vst [vmem:[%s153 + $0xa0] sm:%s145] %v194
                %v196 = vld [vmem:[%s152 + $0x128] sm:%s145]
                %197 = vst [vmem:[%s153 + $0xa8] sm:%s145] %v196
                %v198 = vld [vmem:[%s152 + $0x130] sm:%s145]
                %199 = vst [vmem:[%s153 + $0xb0] sm:%s145] %v198
                %v200 = vld [vmem:[%s152 + $0x138] sm:%s145]
                %201 = vst [vmem:[%s153 + $0xb8] sm:%s145] %v200
                %v202 = vld [vmem:[%s152 + $0x180] sm:%s145]
                %203 = vst [vmem:[%s153 + $0xc0] sm:%s145] %v202
                %v204 = vld [vmem:[%s152 + $0x188] sm:%s145]
                %205 = vst [vmem:[%s153 + $0xc8] sm:%s145] %v204
                %v206 = vld [vmem:[%s152 + $0x190] sm:%s145]
                %207 = vst [vmem:[%s153 + $0xd0] sm:%s145] %v206
                %v208 = vld [vmem:[%s152 + $0x198] sm:%s145]
                %209 = vst [vmem:[%s153 + $0xd8] sm:%s145] %v208
                %v210 = vld [vmem:[%s152 + $0x1a0] sm:%s145]
                %211 = vst [vmem:[%s153 + $0xe0] sm:%s145] %v210
                %v212 = vld [vmem:[%s152 + $0x1a8] sm:%s145]
                %213 = vst [vmem:[%s153 + $0xe8] sm:%s145] %v212
                %v214 = vld [vmem:[%s152 + $0x1b0] sm:%s145]
                %215 = vst [vmem:[%s153 + $0xf0] sm:%s145] %v214
                %v216 = vld [vmem:[%s152 + $0x1b8] sm:%s145]
                %217 = vst [vmem:[%s153 + $0xf8] sm:%s145] %v216
              $region45: #{net_forward.1} parent=39 // loop_footer
                %s151 = sadd.s32 1, %s147
              $region46: #{net_forward.1} parent=39 // loop_footer_branch
                %146 = sbr.rel target = $region42
              $region47: #{net_forward.1} parent=39 // loop_exit
                _
            $region40: #{net_forward.1} parent=31 // pred_fallthru
              _
          $region32: #{net_forward.1} parent=27 // pred_fallthru
            _
          %294 = vnop
        $region28: #{net_forward.1} parent=23 // pred_fallthru
          _
      $region24: #{net_forward.1} parent=5 // pred_fallthru
        _
      %p295 = scmp.le.s32.totalorder 1, %s9
      %p296 = scmp.lt.s32.totalorder %s9, 3
      %p297 = pnand %p295, %p296
      %p298 = pneg %p297
      // Predicated region
      $region63: #{net_forward.1} parent=5 // pred_check
        _
      $region64: #{net_forward.1} parent=5 // pred_check_branch
        %300 = sbr.rel (%p297) target = $region66
      $region65: #{net_forward.1} parent=5 // pred_region
        %s301 = ssub.s32 %s9, 1
        %s302 = sand.u32 %s22, 1
        %s303 = sand.u32 %s22, 1
        %s304 = smul.addr %s303, 256
        %s305 = scalar_lea.vmem [#allocation2], %s304
        // Predicated region
        $region67: #{net_forward.1} parent=65 // pred_check
          %p306 = pneg %p35
        $region68: #{net_forward.1} parent=65 // pred_check_branch
          %308 = sbr.rel (%p306) target = $region70
        $region69: #{net_forward.1} parent=65 // pred_region
          _
        $region70: #{net_forward.1} parent=65 // pred_fallthru
          _
        %s309 = sand.u32 %s22, 1
        %s310 = sand.u32 %s22, 1
        %s311 = smul.addr %s310, 256
        %s312 = scalar_lea.vmem [#allocation2], %s311
        %p313 = pneg %p35
        %p314 = pneg %p32
        %p315 = pneg %p56
        %p316 = pneg %p53
        %p317 = pneg %p77
        %p318 = pneg %p74
        %p319 = pneg %p103
        %p320 = pneg %p100
        %s321 = smul.u32 8, %s14
        %p322 = scmp.lt.s32.totalorder %s321, 15
        %s323 = scalar_select %p322, %s321, 15
        %s324 = smul.addr %s323, 8
        %s325 = scalar_lea.vmem %s3, %s324
        %s326 = smul.u32 8, %s14
        %s327 = smul.u32 8, %s14
        %p328 = scmp.lt.s32.totalorder %s327, 15
        %s329 = scalar_select %p328, %s327, 15
        %s330 = smul.addr %s329, 8
        %s331 = scalar_lea.vmem %s3, %s330
        %s332 = smul.u32 8, %s14
        %v333 = vld [vmem:[%s1] sm:$0xff]
        %v334 = vld [vmem:[%s1 + $0x8] sm:$0xff]
        %v335 = vld [vmem:[%s1 + $0x10] sm:$0xff]
        %v336 = vld [vmem:[%s1 + $0x18] sm:$0xff]
        %v337 = vld [vmem:[%s1 + $0x20] sm:$0xf]
        %v338 = vld [vmem:[%s305] sm:$0xff]
        %v339 = vld [vmem:[%s305 + $0x8] sm:$0xff]
        %v340 = vld [vmem:[%s305 + $0x10] sm:$0xff]
        %v341 = vld [vmem:[%s305 + $0x18] sm:$0xff]
        %v342 = vld [vmem:[%s305 + $0x20] sm:$0xff]
        %v343 = vld [vmem:[%s305 + $0x28] sm:$0xff]
        %v344 = vld [vmem:[%s305 + $0x30] sm:$0xff]
        %v345 = vld [vmem:[%s305 + $0x38] sm:$0xff]
        %vm346 = vcmask 293888
        %v348 = vsel %vm346, %v338, 0
        %v351 = vsel %vm346, %v339, 0
        %v354 = vsel %vm346, %v340, 0
        %v357 = vsel %vm346, %v341, 0
        %v360 = vsel %vm346, %v342, 0
        %v363 = vsel %vm346, %v343, 0
        %v366 = vsel %vm346, %v344, 0
        %v369 = vsel %vm346, %v345, 0
        %vm371 = vcmask 1043456
        %v373 = vsel %vm371, %v337, 0
        %375 = vmatprep.subr.mxu0 0.0
        %376 = vmatpush1.msra.mxu0 0.0
        %377 = vmatprep.subr.mxu0 0.0
        %378 = vmatpush1.msra.mxu0 0.0
        %379 = vmatprep.subr.mxu0 0.0
        %380 = vmatpush1.msra.mxu0 0.0
        %381 = vmatprep.subr.mxu0 0.0
        %382 = vmatpush1.msra.mxu0 0.0
        %383 = vmatprep.subr.mxu0 0.0
        %384 = vmatpush1.msra.mxu0 0.0
        %385 = vmatprep.subr.mxu0 0.0
        %386 = vmatpush1.msra.mxu0 0.0
        %387 = vmatprep.subr.mxu0 0.0
        %388 = vmatpush1.msra.mxu0 0.0
        %389 = vmatprep.subr.mxu0 0.0
        %390 = vmatpush1.msra.mxu0 0.0
        %391 = vmatprep.subr.mxu0 0.0
        %392 = vmatpush1.msra.mxu0 0.0
        %393 = vmatprep.subr.mxu0 0.0
        %394 = vmatpush1.msra.mxu0 0.0
        %395 = vmatprep.subr.mxu0 0.0
        %396 = vmatpush1.msra.mxu0 0.0
        %397 = vmatprep.subr.mxu0 0.0
        %398 = vmatpush1.msra.mxu0 %v373
        %399 = vmatprep.subr.mxu0 0.0
        %400 = vmatpush1.msra.mxu0 %v336
        %401 = vmatprep.subr.mxu0 0.0
        %402 = vmatpush1.msra.mxu0 %v335
        %403 = vmatprep.subr.mxu0 0.0
        %404 = vmatpush1.msra.mxu0 %v334
        %405 = vmatprep.subr.mxu0 0.0
        %406 = vmatpush1.msra.mxu0 %v333
        %407 = vmatprep.subr.mxu0 0.0
        %408 = vmatpush2.msra.mxu0 0.0
        %409 = vmatprep.subr.mxu0 0.0
        %410 = vmatpush2.msra.mxu0 0.0
        %411 = vmatprep.subr.mxu0 0.0
        %412 = vmatpush2.msra.mxu0 0.0
        %413 = vmatprep.subr.mxu0 0.0
        %414 = vmatpush2.msra.mxu0 0.0
        %415 = vmatprep.subr.mxu0 0.0
        %416 = vmatpush2.msra.mxu0 0.0
        %417 = vmatprep.subr.mxu0 0.0
        %418 = vmatpush2.msra.mxu0 0.0
        %419 = vmatprep.subr.mxu0 0.0
        %420 = vmatpush2.msra.mxu0 0.0
        %421 = vmatprep.subr.mxu0 0.0
        %422 = vmatpush2.msra.mxu0 0.0
        %423 = vmatprep.subr.mxu0 0.0
        %424 = vmatpush2.msra.mxu0 0.0
        %425 = vmatprep.subr.mxu0 0.0
        %426 = vmatpush2.msra.mxu0 0.0
        %427 = vmatprep.subr.mxu0 0.0
        %428 = vmatpush2.msra.mxu0 0.0
        %429 = vmatprep.subr.mxu0 0.0
        %430 = vmatpush2.msra.mxu0 0.0
        %431 = vmatprep.subr.mxu0 0.0
        %432 = vmatpush2.msra.mxu0 0.0
        %433 = vmatprep.subr.mxu0 0.0
        %434 = vmatpush2.msra.mxu0 0.0
        %435 = vmatprep.subr.mxu0 0.0
        %436 = vmatpush2.msra.mxu0 0.0
        %437 = vmatprep.subr.mxu0 0.0
        %438 = vmatpush2.msra.mxu0 0.0
        %439 = vmatprep.mubr.f32.mxu0 0.0
        %440 = vmatmul.mubr.f32.gmra.mxu0 %v348
        %v441 = vpop.f32.mrf.mxu0
        %v442 = vadd.f32 0.0, %v441
        %v443 = vpop.f32.mrf.mxu0
        %444 = vmatprep.mubr.f32.mxu0 0.0
        %445 = vmatmul.mubr.f32.gmra.mxu0 %v351
        %v446 = vpop.f32.mrf.mxu0
        %v447 = vadd.f32 0.0, %v446
        %v448 = vpop.f32.mrf.mxu0
        %449 = vmatprep.mubr.f32.mxu0 0.0
        %450 = vmatmul.mubr.f32.gmra.mxu0 %v354
        %v451 = vpop.f32.mrf.mxu0
        %v452 = vadd.f32 0.0, %v451
        %v453 = vpop.f32.mrf.mxu0
        %454 = vmatprep.mubr.f32.mxu0 0.0
        %455 = vmatmul.mubr.f32.gmra.mxu0 %v357
        %v456 = vpop.f32.mrf.mxu0
        %v457 = vadd.f32 0.0, %v456
        %v458 = vpop.f32.mrf.mxu0
        %459 = vmatprep.mubr.f32.mxu0 0.0
        %460 = vmatmul.mubr.f32.gmra.mxu0 %v360
        %v461 = vpop.f32.mrf.mxu0
        %v462 = vadd.f32 0.0, %v461
        %v463 = vpop.f32.mrf.mxu0
        %464 = vmatprep.mubr.f32.mxu0 0.0
        %465 = vmatmul.mubr.f32.gmra.mxu0 %v363
        %v466 = vpop.f32.mrf.mxu0
        %v467 = vadd.f32 0.0, %v466
        %v468 = vpop.f32.mrf.mxu0
        %469 = vmatprep.mubr.f32.mxu0 0.0
        %470 = vmatmul.mubr.f32.gmra.mxu0 %v366
        %v471 = vpop.f32.mrf.mxu0
        %v472 = vadd.f32 0.0, %v471
        %v473 = vpop.f32.mrf.mxu0
        %474 = vmatprep.mubr.f32.mxu0 0.0
        %475 = vmatmul.mubr.f32.gmra.mxu0 %v369
        %v476 = vpop.f32.mrf.mxu0
        %v477 = vadd.f32 0.0, %v476
        %v478 = vpop.f32.mrf.mxu0
        %479 = vdwg.mxu0
        %s480 = scalar_lea.vmem %s305, 64 [#allocation2]
        %v481 = vld [vmem:[%s480] sm:$0xff]
        %v482 = vld [vmem:[%s480 + $0x8] sm:$0xff]
        %v483 = vld [vmem:[%s480 + $0x10] sm:$0xff]
        %v484 = vld [vmem:[%s480 + $0x18] sm:$0xff]
        %v485 = vld [vmem:[%s480 + $0x20] sm:$0xff]
        %v486 = vld [vmem:[%s480 + $0x28] sm:$0xff]
        %v487 = vld [vmem:[%s480 + $0x30] sm:$0xff]
        %v488 = vld [vmem:[%s480 + $0x38] sm:$0xff]
        %v490 = vsel %vm346, %v481, 0
        %v493 = vsel %vm346, %v482, 0
        %v496 = vsel %vm346, %v483, 0
        %v499 = vsel %vm346, %v484, 0
        %v502 = vsel %vm346, %v485, 0
        %v505 = vsel %vm346, %v486, 0
        %v508 = vsel %vm346, %v487, 0
        %v511 = vsel %vm346, %v488, 0
        %513 = vmatprep.subr.mxu0 0.0
        %514 = vmatpush1.msra.mxu0 0.0
        %515 = vmatprep.subr.mxu0 0.0
        %516 = vmatpush1.msra.mxu0 0.0
        %517 = vmatprep.subr.mxu0 0.0
        %518 = vmatpush1.msra.mxu0 0.0
        %519 = vmatprep.subr.mxu0 0.0
        %520 = vmatpush1.msra.mxu0 0.0
        %521 = vmatprep.subr.mxu0 0.0
        %522 = vmatpush1.msra.mxu0 0.0
        %523 = vmatprep.subr.mxu0 0.0
        %524 = vmatpush1.msra.mxu0 0.0
        %525 = vmatprep.subr.mxu0 0.0
        %526 = vmatpush1.msra.mxu0 0.0
        %527 = vmatprep.subr.mxu0 0.0
        %528 = vmatpush1.msra.mxu0 0.0
        %529 = vmatprep.subr.mxu0 0.0
        %530 = vmatpush1.msra.mxu0 0.0
        %531 = vmatprep.subr.mxu0 0.0
        %532 = vmatpush1.msra.mxu0 0.0
        %533 = vmatprep.subr.mxu0 0.0
        %534 = vmatpush1.msra.mxu0 0.0
        %535 = vmatprep.subr.mxu0 0.0
        %536 = vmatpush1.msra.mxu0 %v373
        %537 = vmatprep.subr.mxu0 0.0
        %538 = vmatpush1.msra.mxu0 %v336
        %539 = vmatprep.subr.mxu0 0.0
        %540 = vmatpush1.msra.mxu0 %v335
        %541 = vmatprep.subr.mxu0 0.0
        %542 = vmatpush1.msra.mxu0 %v334
        %543 = vmatprep.subr.mxu0 0.0
        %544 = vmatpush1.msra.mxu0 %v333
        %545 = vmatprep.subr.mxu0 0.0
        %546 = vmatpush2.msra.mxu0 0.0
        %547 = vmatprep.subr.mxu0 0.0
        %548 = vmatpush2.msra.mxu0 0.0
        %549 = vmatprep.subr.mxu0 0.0
        %550 = vmatpush2.msra.mxu0 0.0
        %551 = vmatprep.subr.mxu0 0.0
        %552 = vmatpush2.msra.mxu0 0.0
        %553 = vmatprep.subr.mxu0 0.0
        %554 = vmatpush2.msra.mxu0 0.0
        %555 = vmatprep.subr.mxu0 0.0
        %556 = vmatpush2.msra.mxu0 0.0
        %557 = vmatprep.subr.mxu0 0.0
        %558 = vmatpush2.msra.mxu0 0.0
        %559 = vmatprep.subr.mxu0 0.0
        %560 = vmatpush2.msra.mxu0 0.0
        %561 = vmatprep.subr.mxu0 0.0
        %562 = vmatpush2.msra.mxu0 0.0
        %563 = vmatprep.subr.mxu0 0.0
        %564 = vmatpush2.msra.mxu0 0.0
        %565 = vmatprep.subr.mxu0 0.0
        %566 = vmatpush2.msra.mxu0 0.0
        %567 = vmatprep.subr.mxu0 0.0
        %568 = vmatpush2.msra.mxu0 0.0
        %569 = vmatprep.subr.mxu0 0.0
        %570 = vmatpush2.msra.mxu0 0.0
        %571 = vmatprep.subr.mxu0 0.0
        %572 = vmatpush2.msra.mxu0 0.0
        %573 = vmatprep.subr.mxu0 0.0
        %574 = vmatpush2.msra.mxu0 0.0
        %575 = vmatprep.subr.mxu0 0.0
        %576 = vmatpush2.msra.mxu0 0.0
        %577 = vmatprep.mubr.f32.mxu0 0.0
        %578 = vmatmul.mubr.f32.gmra.mxu0 %v490
        %v579 = vpop.f32.mrf.mxu0
        %v580 = vadd.f32 0.0, %v579
        %v581 = vpop.f32.mrf.mxu0
        %582 = vmatprep.mubr.f32.mxu0 0.0
        %583 = vmatmul.mubr.f32.gmra.mxu0 %v493
        %v584 = vpop.f32.mrf.mxu0
        %v585 = vadd.f32 0.0, %v584
        %v586 = vpop.f32.mrf.mxu0
        %587 = vmatprep.mubr.f32.mxu0 0.0
        %588 = vmatmul.mubr.f32.gmra.mxu0 %v496
        %v589 = vpop.f32.mrf.mxu0
        %v590 = vadd.f32 0.0, %v589
        %v591 = vpop.f32.mrf.mxu0
        %592 = vmatprep.mubr.f32.mxu0 0.0
        %593 = vmatmul.mubr.f32.gmra.mxu0 %v499
        %v594 = vpop.f32.mrf.mxu0
        %v595 = vadd.f32 0.0, %v594
        %v596 = vpop.f32.mrf.mxu0
        %597 = vmatprep.mubr.f32.mxu0 0.0
        %598 = vmatmul.mubr.f32.gmra.mxu0 %v502
        %v599 = vpop.f32.mrf.mxu0
        %v600 = vadd.f32 0.0, %v599
        %v601 = vpop.f32.mrf.mxu0
        %602 = vmatprep.mubr.f32.mxu0 0.0
        %603 = vmatmul.mubr.f32.gmra.mxu0 %v505
        %v604 = vpop.f32.mrf.mxu0
        %v605 = vadd.f32 0.0, %v604
        %v606 = vpop.f32.mrf.mxu0
        %607 = vmatprep.mubr.f32.mxu0 0.0
        %608 = vmatmul.mubr.f32.gmra.mxu0 %v508
        %v609 = vpop.f32.mrf.mxu0
        %v610 = vadd.f32 0.0, %v609
        %v611 = vpop.f32.mrf.mxu0
        %612 = vmatprep.mubr.f32.mxu0 0.0
        %613 = vmatmul.mubr.f32.gmra.mxu0 %v511
        %v614 = vpop.f32.mrf.mxu0
        %v615 = vadd.f32 0.0, %v614
        %v616 = vpop.f32.mrf.mxu0
        %617 = vdwg.mxu0
        %v618 = vmax.f32 %v442, %v580
        %v619 = vmax.f32 %v447, %v585
        %v620 = vmax.f32 %v452, %v590
        %v621 = vmax.f32 %v457, %v595
        %v622 = vmax.f32 %v462, %v600
        %v623 = vmax.f32 %v467, %v605
        %v624 = vmax.f32 %v472, %v610
        %v625 = vmax.f32 %v477, %v615
        %s626 = scalar_lea.vmem %s305, 128 [#allocation2]
        %v627 = vld [vmem:[%s626] sm:$0xff]
        %v628 = vld [vmem:[%s626 + $0x8] sm:$0xff]
        %v629 = vld [vmem:[%s626 + $0x10] sm:$0xff]
        %v630 = vld [vmem:[%s626 + $0x18] sm:$0xff]
        %v631 = vld [vmem:[%s626 + $0x20] sm:$0xff]
        %v632 = vld [vmem:[%s626 + $0x28] sm:$0xff]
        %v633 = vld [vmem:[%s626 + $0x30] sm:$0xff]
        %v634 = vld [vmem:[%s626 + $0x38] sm:$0xff]
        %v636 = vsel %vm346, %v627, 0
        %v639 = vsel %vm346, %v628, 0
        %v642 = vsel %vm346, %v629, 0
        %v645 = vsel %vm346, %v630, 0
        %v648 = vsel %vm346, %v631, 0
        %v651 = vsel %vm346, %v632, 0
        %v654 = vsel %vm346, %v633, 0
        %v657 = vsel %vm346, %v634, 0
        %659 = vmatprep.subr.mxu0 0.0
        %660 = vmatpush1.msra.mxu0 0.0
        %661 = vmatprep.subr.mxu0 0.0
        %662 = vmatpush1.msra.mxu0 0.0
        %663 = vmatprep.subr.mxu0 0.0
        %664 = vmatpush1.msra.mxu0 0.0
        %665 = vmatprep.subr.mxu0 0.0
        %666 = vmatpush1.msra.mxu0 0.0
        %667 = vmatprep.subr.mxu0 0.0
        %668 = vmatpush1.msra.mxu0 0.0
        %669 = vmatprep.subr.mxu0 0.0
        %670 = vmatpush1.msra.mxu0 0.0
        %671 = vmatprep.subr.mxu0 0.0
        %672 = vmatpush1.msra.mxu0 0.0
        %673 = vmatprep.subr.mxu0 0.0
        %674 = vmatpush1.msra.mxu0 0.0
        %675 = vmatprep.subr.mxu0 0.0
        %676 = vmatpush1.msra.mxu0 0.0
        %677 = vmatprep.subr.mxu0 0.0
        %678 = vmatpush1.msra.mxu0 0.0
        %679 = vmatprep.subr.mxu0 0.0
        %680 = vmatpush1.msra.mxu0 0.0
        %681 = vmatprep.subr.mxu0 0.0
        %682 = vmatpush1.msra.mxu0 %v373
        %683 = vmatprep.subr.mxu0 0.0
        %684 = vmatpush1.msra.mxu0 %v336
        %685 = vmatprep.subr.mxu0 0.0
        %686 = vmatpush1.msra.mxu0 %v335
        %687 = vmatprep.subr.mxu0 0.0
        %688 = vmatpush1.msra.mxu0 %v334
        %689 = vmatprep.subr.mxu0 0.0
        %690 = vmatpush1.msra.mxu0 %v333
        %691 = vmatprep.subr.mxu0 0.0
        %692 = vmatpush2.msra.mxu0 0.0
        %693 = vmatprep.subr.mxu0 0.0
        %694 = vmatpush2.msra.mxu0 0.0
        %695 = vmatprep.subr.mxu0 0.0
        %696 = vmatpush2.msra.mxu0 0.0
        %697 = vmatprep.subr.mxu0 0.0
        %698 = vmatpush2.msra.mxu0 0.0
        %699 = vmatprep.subr.mxu0 0.0
        %700 = vmatpush2.msra.mxu0 0.0
        %701 = vmatprep.subr.mxu0 0.0
        %702 = vmatpush2.msra.mxu0 0.0
        %703 = vmatprep.subr.mxu0 0.0
        %704 = vmatpush2.msra.mxu0 0.0
        %705 = vmatprep.subr.mxu0 0.0
        %706 = vmatpush2.msra.mxu0 0.0
        %707 = vmatprep.subr.mxu0 0.0
        %708 = vmatpush2.msra.mxu0 0.0
        %709 = vmatprep.subr.mxu0 0.0
        %710 = vmatpush2.msra.mxu0 0.0
        %711 = vmatprep.subr.mxu0 0.0
        %712 = vmatpush2.msra.mxu0 0.0
        %713 = vmatprep.subr.mxu0 0.0
        %714 = vmatpush2.msra.mxu0 0.0
        %715 = vmatprep.subr.mxu0 0.0
        %716 = vmatpush2.msra.mxu0 0.0
        %717 = vmatprep.subr.mxu0 0.0
        %718 = vmatpush2.msra.mxu0 0.0
        %719 = vmatprep.subr.mxu0 0.0
        %720 = vmatpush2.msra.mxu0 0.0
        %721 = vmatprep.subr.mxu0 0.0
        %722 = vmatpush2.msra.mxu0 0.0
        %723 = vmatprep.mubr.f32.mxu0 0.0
        %724 = vmatmul.mubr.f32.gmra.mxu0 %v636
        %v725 = vpop.f32.mrf.mxu0
        %v726 = vadd.f32 0.0, %v725
        %v727 = vpop.f32.mrf.mxu0
        %728 = vmatprep.mubr.f32.mxu0 0.0
        %729 = vmatmul.mubr.f32.gmra.mxu0 %v639
        %v730 = vpop.f32.mrf.mxu0
        %v731 = vadd.f32 0.0, %v730
        %v732 = vpop.f32.mrf.mxu0
        %733 = vmatprep.mubr.f32.mxu0 0.0
        %734 = vmatmul.mubr.f32.gmra.mxu0 %v642
        %v735 = vpop.f32.mrf.mxu0
        %v736 = vadd.f32 0.0, %v735
        %v737 = vpop.f32.mrf.mxu0
        %738 = vmatprep.mubr.f32.mxu0 0.0
        %739 = vmatmul.mubr.f32.gmra.mxu0 %v645
        %v740 = vpop.f32.mrf.mxu0
        %v741 = vadd.f32 0.0, %v740
        %v742 = vpop.f32.mrf.mxu0
        %743 = vmatprep.mubr.f32.mxu0 0.0
        %744 = vmatmul.mubr.f32.gmra.mxu0 %v648
        %v745 = vpop.f32.mrf.mxu0
        %v746 = vadd.f32 0.0, %v745
        %v747 = vpop.f32.mrf.mxu0
        %748 = vmatprep.mubr.f32.mxu0 0.0
        %749 = vmatmul.mubr.f32.gmra.mxu0 %v651
        %v750 = vpop.f32.mrf.mxu0
        %v751 = vadd.f32 0.0, %v750
        %v752 = vpop.f32.mrf.mxu0
        %753 = vmatprep.mubr.f32.mxu0 0.0
        %754 = vmatmul.mubr.f32.gmra.mxu0 %v654
        %v755 = vpop.f32.mrf.mxu0
        %v756 = vadd.f32 0.0, %v755
        %v757 = vpop.f32.mrf.mxu0
        %758 = vmatprep.mubr.f32.mxu0 0.0
        %759 = vmatmul.mubr.f32.gmra.mxu0 %v657
        %v760 = vpop.f32.mrf.mxu0
        %v761 = vadd.f32 0.0, %v760
        %v762 = vpop.f32.mrf.mxu0
        %763 = vdwg.mxu0
        %v764 = vmax.f32 %v618, %v726
        %v765 = vmax.f32 %v619, %v731
        %v766 = vmax.f32 %v620, %v736
        %v767 = vmax.f32 %v621, %v741
        %v768 = vmax.f32 %v622, %v746
        %v769 = vmax.f32 %v623, %v751
        %v770 = vmax.f32 %v624, %v756
        %v771 = vmax.f32 %v625, %v761
        %s772 = scalar_lea.vmem %s305, 192 [#allocation2]
        %v773 = vld [vmem:[%s772] sm:$0xff]
        %v774 = vld [vmem:[%s772 + $0x8] sm:$0xff]
        %v775 = vld [vmem:[%s772 + $0x10] sm:$0xff]
        %v776 = vld [vmem:[%s772 + $0x18] sm:$0xff]
        %v777 = vld [vmem:[%s772 + $0x20] sm:$0xff]
        %v778 = vld [vmem:[%s772 + $0x28] sm:$0xff]
        %v779 = vld [vmem:[%s772 + $0x30] sm:$0xff]
        %v780 = vld [vmem:[%s772 + $0x38] sm:$0xff]
        %v782 = vsel %vm346, %v773, 0
        %v785 = vsel %vm346, %v774, 0
        %v788 = vsel %vm346, %v775, 0
        %v791 = vsel %vm346, %v776, 0
        %v794 = vsel %vm346, %v777, 0
        %v797 = vsel %vm346, %v778, 0
        %v800 = vsel %vm346, %v779, 0
        %v803 = vsel %vm346, %v780, 0
        %805 = vmatprep.subr.mxu0 0.0
        %806 = vmatpush1.msra.mxu0 0.0
        %807 = vmatprep.subr.mxu0 0.0
        %808 = vmatpush1.msra.mxu0 0.0
        %809 = vmatprep.subr.mxu0 0.0
        %810 = vmatpush1.msra.mxu0 0.0
        %811 = vmatprep.subr.mxu0 0.0
        %812 = vmatpush1.msra.mxu0 0.0
        %813 = vmatprep.subr.mxu0 0.0
        %814 = vmatpush1.msra.mxu0 0.0
        %815 = vmatprep.subr.mxu0 0.0
        %816 = vmatpush1.msra.mxu0 0.0
        %817 = vmatprep.subr.mxu0 0.0
        %818 = vmatpush1.msra.mxu0 0.0
        %819 = vmatprep.subr.mxu0 0.0
        %820 = vmatpush1.msra.mxu0 0.0
        %821 = vmatprep.subr.mxu0 0.0
        %822 = vmatpush1.msra.mxu0 0.0
        %823 = vmatprep.subr.mxu0 0.0
        %824 = vmatpush1.msra.mxu0 0.0
        %825 = vmatprep.subr.mxu0 0.0
        %826 = vmatpush1.msra.mxu0 0.0
        %827 = vmatprep.subr.mxu0 0.0
        %828 = vmatpush1.msra.mxu0 %v373
        %829 = vmatprep.subr.mxu0 0.0
        %830 = vmatpush1.msra.mxu0 %v336
        %831 = vmatprep.subr.mxu0 0.0
        %832 = vmatpush1.msra.mxu0 %v335
        %833 = vmatprep.subr.mxu0 0.0
        %834 = vmatpush1.msra.mxu0 %v334
        %835 = vmatprep.subr.mxu0 0.0
        %836 = vmatpush1.msra.mxu0 %v333
        %837 = vmatprep.subr.mxu0 0.0
        %838 = vmatpush2.msra.mxu0 0.0
        %839 = vmatprep.subr.mxu0 0.0
        %840 = vmatpush2.msra.mxu0 0.0
        %841 = vmatprep.subr.mxu0 0.0
        %842 = vmatpush2.msra.mxu0 0.0
        %843 = vmatprep.subr.mxu0 0.0
        %844 = vmatpush2.msra.mxu0 0.0
        %845 = vmatprep.subr.mxu0 0.0
        %846 = vmatpush2.msra.mxu0 0.0
        %847 = vmatprep.subr.mxu0 0.0
        %848 = vmatpush2.msra.mxu0 0.0
        %849 = vmatprep.subr.mxu0 0.0
        %850 = vmatpush2.msra.mxu0 0.0
        %851 = vmatprep.subr.mxu0 0.0
        %852 = vmatpush2.msra.mxu0 0.0
        %853 = vmatprep.subr.mxu0 0.0
        %854 = vmatpush2.msra.mxu0 0.0
        %855 = vmatprep.subr.mxu0 0.0
        %856 = vmatpush2.msra.mxu0 0.0
        %857 = vmatprep.subr.mxu0 0.0
        %858 = vmatpush2.msra.mxu0 0.0
        %859 = vmatprep.subr.mxu0 0.0
        %860 = vmatpush2.msra.mxu0 0.0
        %861 = vmatprep.subr.mxu0 0.0
        %862 = vmatpush2.msra.mxu0 0.0
        %863 = vmatprep.subr.mxu0 0.0
        %864 = vmatpush2.msra.mxu0 0.0
        %865 = vmatprep.subr.mxu0 0.0
        %866 = vmatpush2.msra.mxu0 0.0
        %867 = vmatprep.subr.mxu0 0.0
        %868 = vmatpush2.msra.mxu0 0.0
        %869 = vmatprep.mubr.f32.mxu0 0.0
        %870 = vmatmul.mubr.f32.gmra.mxu0 %v782
        %v871 = vpop.f32.mrf.mxu0
        %v872 = vadd.f32 0.0, %v871
        %v873 = vpop.f32.mrf.mxu0
        %874 = vmatprep.mubr.f32.mxu0 0.0
        %875 = vmatmul.mubr.f32.gmra.mxu0 %v785
        %v876 = vpop.f32.mrf.mxu0
        %v877 = vadd.f32 0.0, %v876
        %v878 = vpop.f32.mrf.mxu0
        %879 = vmatprep.mubr.f32.mxu0 0.0
        %880 = vmatmul.mubr.f32.gmra.mxu0 %v788
        %v881 = vpop.f32.mrf.mxu0
        %v882 = vadd.f32 0.0, %v881
        %v883 = vpop.f32.mrf.mxu0
        %884 = vmatprep.mubr.f32.mxu0 0.0
        %885 = vmatmul.mubr.f32.gmra.mxu0 %v791
        %v886 = vpop.f32.mrf.mxu0
        %v887 = vadd.f32 0.0, %v886
        %v888 = vpop.f32.mrf.mxu0
        %889 = vmatprep.mubr.f32.mxu0 0.0
        %890 = vmatmul.mubr.f32.gmra.mxu0 %v794
        %v891 = vpop.f32.mrf.mxu0
        %v892 = vadd.f32 0.0, %v891
        %v893 = vpop.f32.mrf.mxu0
        %894 = vmatprep.mubr.f32.mxu0 0.0
        %895 = vmatmul.mubr.f32.gmra.mxu0 %v797
        %v896 = vpop.f32.mrf.mxu0
        %v897 = vadd.f32 0.0, %v896
        %v898 = vpop.f32.mrf.mxu0
        %899 = vmatprep.mubr.f32.mxu0 0.0
        %900 = vmatmul.mubr.f32.gmra.mxu0 %v800
        %v901 = vpop.f32.mrf.mxu0
        %v902 = vadd.f32 0.0, %v901
        %v903 = vpop.f32.mrf.mxu0
        %904 = vmatprep.mubr.f32.mxu0 0.0
        %905 = vmatmul.mubr.f32.gmra.mxu0 %v803
        %v906 = vpop.f32.mrf.mxu0
        %v907 = vadd.f32 0.0, %v906
        %v908 = vpop.f32.mrf.mxu0
        %909 = vdwg.mxu0
        %v910 = vmax.f32 %v764, %v872
        %v911 = vmax.f32 %v765, %v877
        %v912 = vmax.f32 %v766, %v882
        %v913 = vmax.f32 %v767, %v887
        %v914 = vmax.f32 %v768, %v892
        %v915 = vmax.f32 %v769, %v897
        %v916 = vmax.f32 %v770, %v902
        %v917 = vmax.f32 %v771, %v907
        %v918 = vld [vmem:[%s2] sm:$0x1]
        %v920 = vlaneseq
        %v921 = vshrl.u32 %v920, 7
        %v922 = vsub.s32 0, %v921
        %v923 = vrot.slane %v918, %v922
        %v925 = vadd.f32 %v910, %v923
        %v926 = vadd.f32 %v911, %v923
        %v927 = vadd.f32 %v912, %v923
        %v928 = vadd.f32 %v913, %v923
        %v929 = vadd.f32 %v914, %v923
        %v930 = vadd.f32 %v915, %v923
        %v931 = vadd.f32 %v916, %v923
        %v932 = vadd.f32 %v917, %v923
        %v933 = vmax.f32 %v925, 0.0
        %v934 = vmax.f32 %v926, 0.0
        %v935 = vmax.f32 %v927, 0.0
        %v936 = vmax.f32 %v928, 0.0
        %v937 = vmax.f32 %v929, 0.0
        %v938 = vmax.f32 %v930, 0.0
        %v939 = vmax.f32 %v931, 0.0
        %v940 = vmax.f32 %v932, 0.0
        %v941 = vxor.u32 %v933, 2147483648
        %v942 = vxor.u32 %v934, 2147483648
        %v943 = vxor.u32 %v935, 2147483648
        %v944 = vxor.u32 %v936, 2147483648
        %v945 = vxor.u32 %v937, 2147483648
        %v946 = vxor.u32 %v938, 2147483648
        %v947 = vxor.u32 %v939, 2147483648
        %v948 = vxor.u32 %v940, 2147483648
        %v949 = vmul.f32 %v941, 1.442695
        %v950 = vpow.pop %v949
        %v951 = vmul.f32 %v942, 1.442695
        %v952 = vpow.pop %v951
        %v953 = vmul.f32 %v943, 1.442695
        %v954 = vpow.pop %v953
        %v955 = vmul.f32 %v944, 1.442695
        %v956 = vpow.pop %v955
        %v957 = vmul.f32 %v945, 1.442695
        %v958 = vpow.pop %v957
        %v959 = vmul.f32 %v946, 1.442695
        %v960 = vpow.pop %v959
        %v961 = vmul.f32 %v947, 1.442695
        %v962 = vpow.pop %v961
        %v963 = vmul.f32 %v948, 1.442695
        %v964 = vpow.pop %v963
        %v965 = vadd.f32 %v950, 1.0
        %v966 = vadd.f32 %v952, 1.0
        %v967 = vadd.f32 %v954, 1.0
        %v968 = vadd.f32 %v956, 1.0
        %v969 = vadd.f32 %v958, 1.0
        %v970 = vadd.f32 %v960, 1.0
        %v971 = vadd.f32 %v962, 1.0
        %v972 = vadd.f32 %v964, 1.0
        %v973 = vrcp.pop %v965
        %v974 = vmul.f32 1.0, %v973
        %v975 = vrcp.pop %v966
        %v976 = vmul.f32 1.0, %v975
        %v977 = vrcp.pop %v967
        %v978 = vmul.f32 1.0, %v977
        %v979 = vrcp.pop %v968
        %v980 = vmul.f32 1.0, %v979
        %v981 = vrcp.pop %v969
        %v982 = vmul.f32 1.0, %v981
        %v983 = vrcp.pop %v970
        %v984 = vmul.f32 1.0, %v983
        %v985 = vrcp.pop %v971
        %v986 = vmul.f32 1.0, %v985
        %v987 = vrcp.pop %v972
        %v988 = vmul.f32 1.0, %v987
        %989 = vst [vmem:[%s331] sm:$0xff] %v974
        %990 = vst [vmem:[%s331 + $0x8] sm:$0xff] %v976
        %991 = vst [vmem:[%s331 + $0x10] sm:$0xff] %v978
        %992 = vst [vmem:[%s331 + $0x18] sm:$0xff] %v980
        %993 = vst [vmem:[%s331 + $0x20] sm:$0xff] %v982
        %994 = vst [vmem:[%s331 + $0x28] sm:$0xff] %v984
        %995 = vst [vmem:[%s331 + $0x30] sm:$0xff] %v986
        %996 = vst [vmem:[%s331 + $0x38] sm:$0xff] %v988
        %s997 = smul.u32 8, %s14
        %p998 = scmp.lt.s32.totalorder %s997, 15
        %s999 = scalar_select %p998, %s997, 15
        %s1000 = smul.addr %s999, 8
        %s1001 = scalar_lea.vmem %s3, %s1000
        // Predicated region
        $region71: #{net_forward.1} parent=65 // pred_check
          %p1002 = pneg %p100
        $region72: #{net_forward.1} parent=65 // pred_check_branch
          %1004 = sbr.rel (%p1002) target = $region74
        $region73: #{net_forward.1} parent=65 // pred_region
          %s1005 = smul.u32 8, %s14
        $region74: #{net_forward.1} parent=65 // pred_fallthru
          _
      $region66: #{net_forward.1} parent=5 // pred_fallthru
        _
      %p1006 = scmp.le.s32.totalorder 2, %s9
      // Predicated region
      $region75: #{net_forward.1} parent=5 // pred_check
        %p1007 = pneg %p1006
      $region76: #{net_forward.1} parent=5 // pred_check_branch
        %1009 = sbr.rel (%p1007) target = $region78
      $region77: #{net_forward.1} parent=5 // pred_region
        %s1010 = ssub.s32 %s9, 2
        // Predicated region
        $region79: #{net_forward.1} parent=77 // pred_check
          %p1011 = pneg %p106
        $region80: #{net_forward.1} parent=77 // pred_check_branch
          %1013 = sbr.rel (%p1011) target = $region82
        $region81: #{net_forward.1} parent=77 // pred_region
          %s1014 = smul.u32 8, %s15
          %p1015 = scmp.lt.s32.totalorder %s1014, 15
          %s1016 = scalar_select %p1015, %s1014, 15
          %s1017 = smul.addr %s1016, 8
          %s1018 = scalar_lea.vmem %s3, %s1017
        $region82: #{net_forward.1} parent=77 // pred_fallthru
          _
      $region78: #{net_forward.1} parent=5 // pred_fallthru
        _
    $region6: #{net_forward.1} parent=1 // loop_footer
      %s13 = sadd.s32 1, %s9
    $region7: #{net_forward.1} parent=1 // loop_footer_branch
      %8 = sbr.rel target = $region3
    $region8: #{net_forward.1} parent=1 // loop_exit
      _

</llo_original>
